<compile_context>
chip_gen: v7x
topology: tpu7x:2x2x1
jax: 0.10.0
libtpu: 0.0.40
codegen_flags: <defaults>
</compile_context>

<pallas_src>
import functools

import jax
import jax.numpy as jnp
from jax import lax
from jax.experimental import pallas as pl
from jax.experimental.pallas import tpu as pltpu

# Hyper-parameters matching the module defaults.
TEMPERATURE = 0.1
ALPHA_WEIGHT = 0.5
ANCHOR_BETA = 0.5
ADJECENT_BETA = 0.5
MARGIN_ANCHOR = 0.1      # unused in the module's forward (kept for fidelity)
MARGIN_ADJECANT = 0.1    # unused in the module's forward
NEGATIVE_BETA = 1.0
EPS = 1e-12              # F.normalize eps


def _hier_loss_kernel(v_hbm_ref, t_ref, out_ref,
                      v_ref, copy_sem,
                      l_a_ref, l_d_ref, acc_cl_ref, acc_dg_ref,
                      *, bs, col_tile):
    j = pl.program_id(0)
    inv_temp = 1.0 / TEMPERATURE
    f32 = jnp.float32

    # ------------------------------ init -------------------------------
    @pl.when(j == 0)
    def _init():
        # Single manual DMA of v into its VMEM home (no pipeline double-buffer).
        cp = pltpu.make_async_copy(v_hbm_ref, v_ref, copy_sem)
        cp.start()
        cp.wait()
        # Normalize v in place: rsqrt (EUP) + multiply, no divide.
        v32 = v_ref[...].astype(f32)
        inv_n = lax.rsqrt(
            jnp.maximum(jnp.sum(v32 * v32, axis=1, keepdims=True), EPS * EPS))
        v_ref[...] = (v32 * inv_n).astype(v_ref.dtype)
        l_a_ref[...] = jnp.zeros_like(l_a_ref)
        l_d_ref[...] = jnp.zeros_like(l_d_ref)
        acc_cl_ref[...] = jnp.zeros_like(acc_cl_ref)
        acc_dg_ref[...] = jnp.zeros_like(acc_dg_ref)

    # ----------------------- per-column-tile work -----------------------
    # Normalize the three text slices of this tile in one fused pass (rsqrt).
    t32 = t_ref[...].astype(f32)                                   # (3, tc, d)
    inv_nt = lax.rsqrt(
        jnp.maximum(jnp.sum(t32 * t32, axis=2, keepdims=True), EPS * EPS))
    t_n = t32 * inv_nt                                             # (3, tc, d)

    # One fused MXU call for anchor+adjacent: contract the lane dim of both
    # operands (no transpose); leading-dim merge (2,tc,d)->(2*tc,d) is free.
    v_n = v_ref[...]                                               # (bs, d)
    t_pos = t_n[0:2].reshape(2 * col_tile, t_n.shape[-1]).astype(v_ref.dtype)
    logits = lax.dot_general(
        v_n, t_pos,
        dimension_numbers=(((1,), (1,)), ((), ())),
        preferred_element_type=f32)                                # (bs, 2*tc)
    scaled = logits * inv_temp

    # Static-shift softmax pieces: |scaled| <= 1/T (unit-norm rows), so
    # exp(scaled - 1/T) <= 1 always and the shift cancels in every logsumexp.
    e = jnp.exp(scaled - inv_temp)                                 # one exp/step
    l_a_ref[...] += jnp.sum(e[:, :col_tile], axis=1, keepdims=True)
    l_d_ref[...] += jnp.sum(e[:, col_tile:], axis=1, keepdims=True)
    # Column-wise term: per-lane partials, cross-lane reduce only at finalize.
    acc_cl_ref[...] += jnp.log(jnp.sum(e, axis=0, keepdims=True))  # (1, 2*tc)

    # Diagonal scores diag[c] = v_n[start + c] . t_n[k, c]; per-lane partials.
    start = pl.multiple_of(j * col_tile, col_tile)
    v_rows = v_ref[pl.ds(start, col_tile), :].astype(f32)          # (tc, d)
    acc_dg_ref[...] += jnp.sum(v_rows[None, :, :] * t_n, axis=2)   # (3, tc)

    # ----------------------------- finalize -----------------------------
    @pl.when(j == pl.num_programs(0) - 1)
    def _finalize():
        inv_bs = 1.0 / bs
        shift_total = bs * inv_temp   # total static shift over bs rows/cols

        # Row-wise logsumexp sums (loss_i): sum_i [1/T + log(l_i)].
        sum_lse_rows_a = (jnp.sum(jnp.log(l_a_ref[...]), keepdims=True)
                          + shift_total)
        sum_lse_rows_d = (jnp.sum(jnp.log(l_d_ref[...]), keepdims=True)
                          + shift_total)

        # Column-wise logsumexp sums (loss_t).
        cl = acc_cl_ref[...]                                       # (1, 2*tc)
        sum_lse_cols_a = jnp.sum(cl[:, :col_tile], keepdims=True) + shift_total
        sum_lse_cols_d = jnp.sum(cl[:, col_tile:], keepdims=True) + shift_total

        # Diagonal score sums.
        sum_dg = jnp.sum(acc_dg_ref[...], axis=1, keepdims=True)   # (3, 1)
        sum_dg_a = sum_dg[0:1, :]
        sum_dg_d = sum_dg[1:2, :]
        sum_dg_n = sum_dg[2:3, :]

        ce_diag_a = sum_dg_a * (inv_temp * inv_bs)
        ce_diag_d = sum_dg_d * (inv_temp * inv_bs)

        loss_i_a = sum_lse_rows_a * inv_bs - ce_diag_a
        loss_t_a = sum_lse_cols_a * inv_bs - ce_diag_a
        loss_i_d = sum_lse_rows_d * inv_bs - ce_diag_d
        loss_t_d = sum_lse_cols_d * inv_bs - ce_diag_d

        loss_pos_a = ALPHA_WEIGHT * loss_i_a + (1.0 - ALPHA_WEIGHT) * loss_t_a
        loss_pos_d = ALPHA_WEIGHT * loss_i_d + (1.0 - ALPHA_WEIGHT) * loss_t_d

        inv_2bs = 1.0 / (2.0 * bs)
        loss_neg_a = jnp.maximum((sum_dg_n - sum_dg_a) * inv_2bs, 0.0)
        loss_neg_d = jnp.maximum((sum_dg_n - sum_dg_d) * inv_2bs, 0.0)
        loss_neg = ANCHOR_BETA * loss_neg_a + ADJECENT_BETA * loss_neg_d

        total = (loss_pos_a + loss_pos_d + NEGATIVE_BETA * loss_neg) / 3.0
        out_ref[...] = total.astype(out_ref.dtype)


def _vmem_capacity_bytes():
    try:
        return int(pltpu.get_tpu_info().vmem_capacity_bytes)
    except Exception:  # best-effort hardware query; fall back to v7x-sized VMEM
        return 64 << 20


def _pick_col_tile(bs, vmem_cap):
    # Budget for one (bs x tc) f32 logits-class block, generation aware:
    # ~10 MiB on 128 MiB parts (v5e/v6e), ~5 MiB on 64 MiB parts (v7x).
    budget_bytes = min(16 << 20, max(4 << 20, vmem_cap // 12))
    budget_elems = budget_bytes // 4
    for t in (1024, 512, 256, 128, 64, 32, 16, 8):
        if bs % t == 0 and bs * t <= budget_elems:
            return t
    # TODO(synk): batch sizes with no multiple-of-8 divisor fall back to one
    # full-width column tile; very large odd bs would need pad+mask instead.
    return bs


def hier_infonce_hardng_loss(video_embd, text_embds, col_tile=None):
    """video_embd: (bs, d); text_embds: (bs, 3, d) -> scalar loss (f32)."""
    bs, d = video_embd.shape
    assert text_embds.shape == (bs, 3, d)

    # One contiguous (3, bs, d) text tensor: a single tile-aligned DMA stream
    # instead of three strided middle-dim slices.
    text_t = jnp.transpose(text_embds, (1, 0, 2))

    # Lane-align the feature dim; zero padding is exact for norms and dots.
    d_p = ((d + 127) // 128) * 128
    if d_p != d:
        video_embd = jnp.pad(video_embd, ((0, 0), (0, d_p - d)))
        text_t = jnp.pad(text_t, ((0, 0), (0, 0), (0, d_p - d)))

    vmem_cap = _vmem_capacity_bytes()
    tc = col_tile if col_tile is not None else _pick_col_tile(bs, vmem_cap)
    assert bs % tc == 0, "column tile must divide the batch size"
    n_tiles = bs // tc

    # Rough working-set estimate for the scoped-VMEM limit.
    bytes_in = video_embd.dtype.itemsize
    est = (bytes_in * (bs * d_p            # resident (normalized) v
                       + 2 * 3 * tc * d_p  # text tile, double-buffered
                       + 2 * tc * d_p)     # merged MXU rhs
           + 4 * (bs * d_p                 # f32 temp during init normalize
                  + 2 * 3 * tc * d_p       # t32 / t_n temporaries
                  + 3 * bs * 2 * tc        # logits / scaled / exp block
                  + 3 * tc * d_p           # diag product temporary
                  + 2 * bs + 8 * tc))      # accumulators
    vmem_limit = int(min(max(int(1.5 * est), 32 << 20), int(0.75 * vmem_cap)))

    grid_spec = pltpu.PrefetchScalarGridSpec(
        num_scalar_prefetch=0,
        grid=(n_tiles,),
        in_specs=[
            # v stays in HBM; the kernel DMAs it exactly once (single residency).
            pl.BlockSpec(memory_space=pl.ANY),
            # one column tile of all three text slices.
            pl.BlockSpec((3, tc, d_p), lambda j: (0, j, 0)),
        ],
        out_specs=pl.BlockSpec((1, 1), lambda j: (0, 0)),
        scratch_shapes=[
            pltpu.VMEM((bs, d_p), video_embd.dtype),  # normalized v (in place)
            pltpu.SemaphoreType.DMA,                  # v copy completion
            pltpu.VMEM((bs, 1), jnp.float32),         # row exp-sums (anchor)
            pltpu.VMEM((bs, 1), jnp.float32),         # row exp-sums (adjacent)
            pltpu.VMEM((1, 2 * tc), jnp.float32),     # per-lane col-lse partials
            pltpu.VMEM((3, tc), jnp.float32),         # per-lane diag partials
        ],
    )

    kernel = functools.partial(_hier_loss_kernel, bs=bs, col_tile=tc)
    out = pl.pallas_call(
        kernel,
        out_shape=jax.ShapeDtypeStruct((1, 1), jnp.float32),
        grid_spec=grid_spec,
        compiler_params=pltpu.CompilerParams(
            dimension_semantics=("arbitrary",),   # grid axis carries reductions
            vmem_limit_bytes=vmem_limit),
    )(video_embd, text_t)
    return out[0, 0]


def _reference(video_embd, text_embds):
    # Pure-JAX reference mirroring the PyTorch module.
    def norm(x):
        n = jnp.sqrt(jnp.sum(x * x, axis=1, keepdims=True))
        return x / jnp.maximum(n, EPS)

    v = norm(video_embd)
    ta = norm(text_embds[:, 0, :])
    tadj = norm(text_embds[:, 1, :])
    tneg = norm(text_embds[:, 2, :])
    bs = v.shape[0]

    def ce(logits):
        return jnp.mean(jax.nn.logsumexp(logits, axis=1)
                        - logits[jnp.arange(bs), jnp.arange(bs)])

    def clip(ev, et):
        li = ev @ et.T
        d_ = jnp.diag(li)
        loss_i = ce(li / TEMPERATURE)
        loss_t = ce(li.T / TEMPERATURE)
        return ALPHA_WEIGHT * loss_i + (1 - ALPHA_WEIGHT) * loss_t, d_

    lpa, spa = clip(v, ta)
    lpd, spd = clip(v, tadj)
    sn = jnp.diag(v @ tneg.T)
    lna = jnp.maximum((sn.sum() - spa.sum()) / (2 * bs), 0.0)
    lnd = jnp.maximum((sn.sum() - spd.sum()) / (2 * bs), 0.0)
    ln = ANCHOR_BETA * lna + ADJECENT_BETA * lnd
    return (lpa + lpd + NEGATIVE_BETA * ln) / 3.0


if __name__ == "__main__":
    key = jax.random.PRNGKey(0)
    k1, k2, k3, k4 = jax.random.split(key, 4)

    # Case 1: small module-consistent shapes, single column tile.
    bs, d = 8, 32
    video_embd = jax.random.normal(k1, (bs, d), dtype=jnp.float32)
    text_embds = jax.random.normal(k2, (bs, 3, d), dtype=jnp.float32)
    loss = jax.block_until_ready(hier_infonce_hardng_loss(video_embd, text_embds))
    ref = _reference(video_embd, text_embds)
    assert jnp.allclose(loss, ref, rtol=1e-4, atol=1e-4), (loss, ref)

    # Case 2: force multiple column tiles to exercise the tiled reduction path.
    bs2, d2 = 16, 32
    v2 = jax.random.normal(k3, (bs2, d2), dtype=jnp.float32)
    t2 = jax.random.normal(k4, (bs2, 3, d2), dtype=jnp.float32)
    loss2 = jax.block_until_ready(hier_infonce_hardng_loss(v2, t2, col_tile=8))
    ref2 = _reference(v2, t2)
    assert jnp.allclose(loss2, ref2, rtol=1e-4, atol=1e-4), (loss2, ref2)

    print("KERNEL_OK")
</pallas_src>

<mosaic_0001>
module attributes {stable_mosaic.version = 11 : i64} {
  func.func @_hier_loss_kernel(%arg0: i32, %arg1: memref<8x128xf32, #tpu.memory_space<any>>, %arg2: memref<3x8x128xf32, #tpu.memory_space<vmem>>, %arg3: memref<1x1xf32, #tpu.memory_space<vmem>>, %arg4: memref<8x128xf32, #tpu.memory_space<vmem>>, %arg5: memref<!tpu.dma_semaphore, #tpu.memory_space<semaphore_mem>>, %arg6: memref<8x1xf32, #tpu.memory_space<vmem>>, %arg7: memref<8x1xf32, #tpu.memory_space<vmem>>, %arg8: memref<1x16xf32, #tpu.memory_space<vmem>>, %arg9: memref<3x8xf32, #tpu.memory_space<vmem>>) attributes {dimension_semantics = [#tpu.dimension_semantics<arbitrary>], iteration_bounds = array<i64: 1>, scalar_prefetch = 0 : i64, scratch_operands = 6 : i64, tpu.core_type = #tpu.core_type<tc>, window_params = [{}, {transform_indices = @transform_1, window_bounds = array<i64: 3, 8, 128>}, {pipeline_mode = #tpu.pipeline_mode<synchronous>, transform_indices = @transform_2, window_bounds = array<i64: 1, 1>}]} {
    %c0_i32 = arith.constant 0 : i32
    %0 = arith.cmpi eq, %arg0, %c0_i32 : i32
    %1 = arith.extui %0 : i1 to i32
    %c0_i32_0 = arith.constant 0 : i32
    %2 = arith.cmpi ne, %1, %c0_i32_0 : i32
    scf.if %2 {
      tpu.enqueue_dma source(%arg1 : memref<8x128xf32, #tpu.memory_space<any>>) target(%arg4 : memref<8x128xf32, #tpu.memory_space<vmem>>) target_semaphore(%arg5 : memref<!tpu.dma_semaphore, #tpu.memory_space<semaphore_mem>>)
      tpu.wait_dma2 semaphore(%arg5 : memref<!tpu.dma_semaphore, #tpu.memory_space<semaphore_mem>>) src(%arg1 : memref<8x128xf32, #tpu.memory_space<any>>) dst(%arg4 : memref<8x128xf32, #tpu.memory_space<vmem>>)
      %c0_32 = arith.constant 0 : index
      %c0_33 = arith.constant 0 : index
      %53 = vector.load %arg4[%c0_32, %c0_33] : memref<8x128xf32, #tpu.memory_space<vmem>>, vector<8x128xf32>
      %54 = arith.mulf %53, %53 : vector<8x128xf32>
      %cst_34 = arith.constant dense<0.000000e+00> : vector<8xf32>
      %55 = vector.multi_reduction <add>, %54, %cst_34 [1] : vector<8x128xf32> to vector<8xf32>
      %56 = vector.shape_cast %55 : vector<8xf32> to vector<8x1xf32>
      %cst_35 = arith.constant 1.000000e-24 : f32
      %57 = vector.broadcast %cst_35 : f32 to vector<8x1xf32>
      %58 = arith.maximumf %56, %57 : vector<8x1xf32>
      %59 = math.rsqrt %58 : vector<8x1xf32>
      %60 = vector.broadcast %59 : vector<8x1xf32> to vector<8x128xf32>
      %61 = arith.mulf %53, %60 : vector<8x128xf32>
      %c0_36 = arith.constant 0 : index
      %c0_37 = arith.constant 0 : index
      %62 = vector.load %arg4[%c0_36, %c0_37] : memref<8x128xf32, #tpu.memory_space<vmem>>, vector<8x128xf32>
      tpu.vector_store %arg4[%c0_36, %c0_37], %61 {strides = array<i32>} : memref<8x128xf32, #tpu.memory_space<vmem>>, vector<8x128xf32>,
      %cst_38 = arith.constant 0.000000e+00 : f32
      %63 = vector.broadcast %cst_38 : f32 to vector<8x1xf32>
      %c0_39 = arith.constant 0 : index
      %c0_40 = arith.constant 0 : index
      %64 = vector.load %arg6[%c0_39, %c0_40] : memref<8x1xf32, #tpu.memory_space<vmem>>, vector<8x1xf32>
      tpu.vector_store %arg6[%c0_39, %c0_40], %63 {strides = array<i32>} : memref<8x1xf32, #tpu.memory_space<vmem>>, vector<8x1xf32>,
      %cst_41 = arith.constant 0.000000e+00 : f32
      %65 = vector.broadcast %cst_41 : f32 to vector<8x1xf32>
      %c0_42 = arith.constant 0 : index
      %c0_43 = arith.constant 0 : index
      %66 = vector.load %arg7[%c0_42, %c0_43] : memref<8x1xf32, #tpu.memory_space<vmem>>, vector<8x1xf32>
      tpu.vector_store %arg7[%c0_42, %c0_43], %65 {strides = array<i32>} : memref<8x1xf32, #tpu.memory_space<vmem>>, vector<8x1xf32>,
      %cst_44 = arith.constant 0.000000e+00 : f32
      %67 = vector.broadcast %cst_44 : f32 to vector<1x16xf32>
      %c0_45 = arith.constant 0 : index
      %c0_46 = arith.constant 0 : index
      %68 = vector.load %arg8[%c0_45, %c0_46] : memref<1x16xf32, #tpu.memory_space<vmem>>, vector<1x16xf32>
      tpu.vector_store %arg8[%c0_45, %c0_46], %67 {strides = array<i32>} : memref<1x16xf32, #tpu.memory_space<vmem>>, vector<1x16xf32>,
      %cst_47 = arith.constant 0.000000e+00 : f32
      %69 = vector.broadcast %cst_47 : f32 to vector<3x8xf32>
      %c0_48 = arith.constant 0 : index
      %c0_49 = arith.constant 0 : index
      %70 = vector.load %arg9[%c0_48, %c0_49] : memref<3x8xf32, #tpu.memory_space<vmem>>, vector<3x8xf32>
      tpu.vector_store %arg9[%c0_48, %c0_49], %69 {strides = array<i32>} : memref<3x8xf32, #tpu.memory_space<vmem>>, vector<3x8xf32>,
    } else {
    }
    %c0 = arith.constant 0 : index
    %c0_1 = arith.constant 0 : index
    %c0_2 = arith.constant 0 : index
    %3 = vector.load %arg2[%c0, %c0_1, %c0_2] : memref<3x8x128xf32, #tpu.memory_space<vmem>>, vector<3x8x128xf32>
    %4 = arith.mulf %3, %3 : vector<3x8x128xf32>
    %cst = arith.constant dense<0.000000e+00> : vector<3x8xf32>
    %5 = vector.multi_reduction <add>, %4, %cst [2] : vector<3x8x128xf32> to vector<3x8xf32>
    %6 = vector.shape_cast %5 : vector<3x8xf32> to vector<3x8x1xf32>
    %cst_3 = arith.constant 1.000000e-24 : f32
    %7 = vector.broadcast %cst_3 : f32 to vector<3x8x1xf32>
    %8 = arith.maximumf %6, %7 : vector<3x8x1xf32>
    %9 = math.rsqrt %8 : vector<3x8x1xf32>
    %10 = vector.broadcast %9 : vector<3x8x1xf32> to vector<3x8x128xf32>
    %11 = arith.mulf %3, %10 : vector<3x8x128xf32>
    %c0_4 = arith.constant 0 : index
    %c0_5 = arith.constant 0 : index
    %12 = vector.load %arg4[%c0_4, %c0_5] : memref<8x128xf32, #tpu.memory_space<vmem>>, vector<8x128xf32>
    %13 = vector.extract_strided_slice %11 {offsets = [0, 0, 0], sizes = [2, 8, 128], strides = [1, 1, 1]} : vector<3x8x128xf32> to vector<2x8x128xf32>
    %14 = vector.shape_cast %13 : vector<2x8x128xf32> to vector<16x128xf32>
    %cst_6 = arith.constant dense<0.000000e+00> : vector<8x16xf32>
    %15 = tpu.matmul %12, %14, %cst_6 {dimension_numbers = #tpu.dot_dimension_numbers<[1], [1], [0], [0], [0, 0, 1, 0], [], []>} : vector<8x128xf32>, vector<16x128xf32>, vector<8x16xf32> -> vector<8x16xf32>
    %cst_7 = arith.constant 1.000000e+01 : f32
    %16 = vector.broadcast %cst_7 : f32 to vector<8x16xf32>
    %17 = arith.mulf %15, %16 : vector<8x16xf32>
    %cst_8 = arith.constant 1.000000e+01 : f32
    %18 = vector.broadcast %cst_8 : f32 to vector<8x16xf32>
    %19 = arith.subf %17, %18 : vector<8x16xf32>
    %20 = math.exp %19 : vector<8x16xf32>
    %c0_9 = arith.constant 0 : index
    %c0_10 = arith.constant 0 : index
    %21 = vector.load %arg6[%c0_9, %c0_10] : memref<8x1xf32, #tpu.memory_space<vmem>>, vector<8x1xf32>
    %22 = vector.extract_strided_slice %20 {offsets = [0, 0], sizes = [8, 8], strides = [1, 1]} : vector<8x16xf32> to vector<8x8xf32>
    %cst_11 = arith.constant dense<0.000000e+00> : vector<8xf32>
    %23 = vector.multi_reduction <add>, %22, %cst_11 [1] : vector<8x8xf32> to vector<8xf32>
    %24 = vector.shape_cast %23 : vector<8xf32> to vector<8x1xf32>
    %25 = arith.addf %21, %24 : vector<8x1xf32>
    %c0_12 = arith.constant 0 : index
    %c0_13 = arith.constant 0 : index
    %26 = vector.load %arg6[%c0_12, %c0_13] : memref<8x1xf32, #tpu.memory_space<vmem>>, vector<8x1xf32>
    tpu.vector_store %arg6[%c0_12, %c0_13], %25 {strides = array<i32>} : memref<8x1xf32, #tpu.memory_space<vmem>>, vector<8x1xf32>,
    %c0_14 = arith.constant 0 : index
    %c0_15 = arith.constant 0 : index
    %27 = vector.load %arg7[%c0_14, %c0_15] : memref<8x1xf32, #tpu.memory_space<vmem>>, vector<8x1xf32>
    %28 = vector.extract_strided_slice %20 {offsets = [0, 8], sizes = [8, 8], strides = [1, 1]} : vector<8x16xf32> to vector<8x8xf32>
    %cst_16 = arith.constant dense<0.000000e+00> : vector<8xf32>
    %29 = vector.multi_reduction <add>, %28, %cst_16 [1] : vector<8x8xf32> to vector<8xf32>
    %30 = vector.shape_cast %29 : vector<8xf32> to vector<8x1xf32>
    %31 = arith.addf %27, %30 : vector<8x1xf32>
    %c0_17 = arith.constant 0 : index
    %c0_18 = arith.constant 0 : index
    %32 = vector.load %arg7[%c0_17, %c0_18] : memref<8x1xf32, #tpu.memory_space<vmem>>, vector<8x1xf32>
    tpu.vector_store %arg7[%c0_17, %c0_18], %31 {strides = array<i32>} : memref<8x1xf32, #tpu.memory_space<vmem>>, vector<8x1xf32>,
    %c0_19 = arith.constant 0 : index
    %c0_20 = arith.constant 0 : index
    %33 = vector.load %arg8[%c0_19, %c0_20] : memref<1x16xf32, #tpu.memory_space<vmem>>, vector<1x16xf32>
    %cst_21 = arith.constant dense<0.000000e+00> : vector<16xf32>
    %34 = vector.multi_reduction <add>, %20, %cst_21 [0] : vector<8x16xf32> to vector<16xf32>
    %35 = vector.shape_cast %34 : vector<16xf32> to vector<1x16xf32>
    %36 = math.log %35 : vector<1x16xf32>
    %37 = arith.addf %33, %36 : vector<1x16xf32>
    %c0_22 = arith.constant 0 : index
    %c0_23 = arith.constant 0 : index
    %38 = vector.load %arg8[%c0_22, %c0_23] : memref<1x16xf32, #tpu.memory_space<vmem>>, vector<1x16xf32>
    tpu.vector_store %arg8[%c0_22, %c0_23], %37 {strides = array<i32>} : memref<1x16xf32, #tpu.memory_space<vmem>>, vector<1x16xf32>,
    %c8_i32 = arith.constant 8 : i32
    %39 = arith.muli %arg0, %c8_i32 : i32
    %40 = tpu.assume_multiple %39, 8 : i32
    %41 = arith.index_cast %40 : i32 to index
    %c0_24 = arith.constant 0 : index
    %42 = vector.load %arg4[%41, %c0_24] : memref<8x128xf32, #tpu.memory_space<vmem>>, vector<8x128xf32>
    %c0_25 = arith.constant 0 : index
    %c0_26 = arith.constant 0 : index
    %43 = vector.load %arg9[%c0_25, %c0_26] : memref<3x8xf32, #tpu.memory_space<vmem>>, vector<3x8xf32>
    %44 = vector.shape_cast %42 : vector<8x128xf32> to vector<1x8x128xf32>
    %45 = vector.broadcast %44 : vector<1x8x128xf32> to vector<3x8x128xf32>
    %46 = arith.mulf %45, %11 : vector<3x8x128xf32>
    %cst_27 = arith.constant dense<0.000000e+00> : vector<3x8xf32>
    %47 = vector.multi_reduction <add>, %46, %cst_27 [2] : vector<3x8x128xf32> to vector<3x8xf32>
    %48 = arith.addf %43, %47 : vector<3x8xf32>
    %c0_28 = arith.constant 0 : index
    %c0_29 = arith.constant 0 : index
    %49 = vector.load %arg9[%c0_28, %c0_29] : memref<3x8xf32, #tpu.memory_space<vmem>>, vector<3x8xf32>
    tpu.vector_store %arg9[%c0_28, %c0_29], %48 {strides = array<i32>} : memref<3x8xf32, #tpu.memory_space<vmem>>, vector<3x8xf32>,
    %c0_i32_30 = arith.constant 0 : i32
    %50 = arith.cmpi eq, %arg0, %c0_i32_30 : i32
    %51 = arith.extui %50 : i1 to i32
    %c0_i32_31 = arith.constant 0 : i32
    %52 = arith.cmpi ne, %51, %c0_i32_31 : i32
    scf.if %52 {
      %c0_32 = arith.constant 0 : index
      %c0_33 = arith.constant 0 : index
      %53 = vector.load %arg6[%c0_32, %c0_33] : memref<8x1xf32, #tpu.memory_space<vmem>>, vector<8x1xf32>
      %54 = math.log %53 : vector<8x1xf32>
      %55 = vector.shape_cast %54 : vector<8x1xf32> to vector<1x8x1xf32>
      %cst_34 = arith.constant dense<0.000000e+00> : vector<1xf32>
      %56 = vector.multi_reduction <add>, %55, %cst_34 [1, 2] : vector<1x8x1xf32> to vector<1xf32>
      %57 = vector.shape_cast %56 : vector<1xf32> to vector<1x1x1xf32>
      %58 = vector.extract %57[0, 0, 0] : f32 from vector<1x1x1xf32>
      %59 = vector.broadcast %58 : f32 to vector<1x1xf32>
      %cst_35 = arith.constant 8.000000e+01 : f32
      %60 = vector.broadcast %cst_35 : f32 to vector<1x1xf32>
      %61 = arith.addf %59, %60 : vector<1x1xf32>
      %c0_36 = arith.constant 0 : index
      %c0_37 = arith.constant 0 : index
      %62 = vector.load %arg7[%c0_36, %c0_37] : memref<8x1xf32, #tpu.memory_space<vmem>>, vector<8x1xf32>
      %63 = math.log %62 : vector<8x1xf32>
      %64 = vector.shape_cast %63 : vector<8x1xf32> to vector<1x8x1xf32>
      %cst_38 = arith.constant dense<0.000000e+00> : vector<1xf32>
      %65 = vector.multi_reduction <add>, %64, %cst_38 [1, 2] : vector<1x8x1xf32> to vector<1xf32>
      %66 = vector.shape_cast %65 : vector<1xf32> to vector<1x1x1xf32>
      %67 = vector.extract %66[0, 0, 0] : f32 from vector<1x1x1xf32>
      %68 = vector.broadcast %67 : f32 to vector<1x1xf32>
      %cst_39 = arith.constant 8.000000e+01 : f32
      %69 = vector.broadcast %cst_39 : f32 to vector<1x1xf32>
      %70 = arith.addf %68, %69 : vector<1x1xf32>
      %c0_40 = arith.constant 0 : index
      %c0_41 = arith.constant 0 : index
      %71 = vector.load %arg8[%c0_40, %c0_41] : memref<1x16xf32, #tpu.memory_space<vmem>>, vector<1x16xf32>
      %72 = vector.extract_strided_slice %71 {offsets = [0, 0], sizes = [1, 8], strides = [1, 1]} : vector<1x16xf32> to vector<1x8xf32>
      %73 = vector.shape_cast %72 : vector<1x8xf32> to vector<1x1x8xf32>
      %cst_42 = arith.constant dense<0.000000e+00> : vector<1xf32>
      %74 = vector.multi_reduction <add>, %73, %cst_42 [1, 2] : vector<1x1x8xf32> to vector<1xf32>
      %75 = vector.shape_cast %74 : vector<1xf32> to vector<1x1x1xf32>
      %76 = vector.extract %75[0, 0, 0] : f32 from vector<1x1x1xf32>
      %77 = vector.broadcast %76 : f32 to vector<1x1xf32>
      %cst_43 = arith.constant 8.000000e+01 : f32
      %78 = vector.broadcast %cst_43 : f32 to vector<1x1xf32>
      %79 = arith.addf %77, %78 : vector<1x1xf32>
      %80 = vector.extract_strided_slice %71 {offsets = [0, 8], sizes = [1, 8], strides = [1, 1]} : vector<1x16xf32> to vector<1x8xf32>
      %81 = vector.shape_cast %80 : vector<1x8xf32> to vector<1x1x8xf32>
      %cst_44 = arith.constant dense<0.000000e+00> : vector<1xf32>
      %82 = vector.multi_reduction <add>, %81, %cst_44 [1, 2] : vector<1x1x8xf32> to vector<1xf32>
      %83 = vector.shape_cast %82 : vector<1xf32> to vector<1x1x1xf32>
      %84 = vector.extract %83[0, 0, 0] : f32 from vector<1x1x1xf32>
      %85 = vector.broadcast %84 : f32 to vector<1x1xf32>
      %cst_45 = arith.constant 8.000000e+01 : f32
      %86 = vector.broadcast %cst_45 : f32 to vector<1x1xf32>
      %87 = arith.addf %85, %86 : vector<1x1xf32>
      %c0_46 = arith.constant 0 : index
      %c0_47 = arith.constant 0 : index
      %88 = vector.load %arg9[%c0_46, %c0_47] : memref<3x8xf32, #tpu.memory_space<vmem>>, vector<3x8xf32>
      %cst_48 = arith.constant dense<0.000000e+00> : vector<3xf32>
      %89 = vector.multi_reduction <add>, %88, %cst_48 [1] : vector<3x8xf32> to vector<3xf32>
      %90 = vector.shape_cast %89 : vector<3xf32> to vector<3x1xf32>
      %91 = vector.extract_strided_slice %90 {offsets = [0, 0], sizes = [1, 1], strides = [1, 1]} : vector<3x1xf32> to vector<1x1xf32>
      %92 = vector.extract_strided_slice %90 {offsets = [1, 0], sizes = [1, 1], strides = [1, 1]} : vector<3x1xf32> to vector<1x1xf32>
      %93 = vector.extract_strided_slice %90 {offsets = [2, 0], sizes = [1, 1], strides = [1, 1]} : vector<3x1xf32> to vector<1x1xf32>
      %cst_49 = arith.constant 1.250000e+00 : f32
      %94 = vector.broadcast %cst_49 : f32 to vector<1x1xf32>
      %95 = arith.mulf %91, %94 : vector<1x1xf32>
      %cst_50 = arith.constant 1.250000e+00 : f32
      %96 = vector.broadcast %cst_50 : f32 to vector<1x1xf32>
      %97 = arith.mulf %92, %96 : vector<1x1xf32>
      %cst_51 = arith.constant 1.250000e-01 : f32
      %98 = vector.broadcast %cst_51 : f32 to vector<1x1xf32>
      %99 = arith.mulf %61, %98 : vector<1x1xf32>
      %100 = arith.subf %99, %95 : vector<1x1xf32>
      %cst_52 = arith.constant 1.250000e-01 : f32
      %101 = vector.broadcast %cst_52 : f32 to vector<1x1xf32>
      %102 = arith.mulf %79, %101 : vector<1x1xf32>
      %103 = arith.subf %102, %95 : vector<1x1xf32>
      %cst_53 = arith.constant 1.250000e-01 : f32
      %104 = vector.broadcast %cst_53 : f32 to vector<1x1xf32>
      %105 = arith.mulf %70, %104 : vector<1x1xf32>
      %106 = arith.subf %105, %97 : vector<1x1xf32>
      %cst_54 = arith.constant 1.250000e-01 : f32
      %107 = vector.broadcast %cst_54 : f32 to vector<1x1xf32>
      %108 = arith.mulf %87, %107 : vector<1x1xf32>
      %109 = arith.subf %108, %97 : vector<1x1xf32>
      %cst_55 = arith.constant 5.000000e-01 : f32
      %110 = vector.broadcast %cst_55 : f32 to vector<1x1xf32>
      %111 = arith.mulf %110, %100 : vector<1x1xf32>
      %cst_56 = arith.constant 5.000000e-01 : f32
      %112 = vector.broadcast %cst_56 : f32 to vector<1x1xf32>
      %113 = arith.mulf %112, %103 : vector<1x1xf32>
      %114 = arith.addf %111, %113 : vector<1x1xf32>
      %cst_57 = arith.constant 5.000000e-01 : f32
      %115 = vector.broadcast %cst_57 : f32 to vector<1x1xf32>
      %116 = arith.mulf %115, %106 : vector<1x1xf32>
      %cst_58 = arith.constant 5.000000e-01 : f32
      %117 = vector.broadcast %cst_58 : f32 to vector<1x1xf32>
      %118 = arith.mulf %117, %109 : vector<1x1xf32>
      %119 = arith.addf %116, %118 : vector<1x1xf32>
      %120 = arith.subf %93, %91 : vector<1x1xf32>
      %cst_59 = arith.constant 6.250000e-02 : f32
      %121 = vector.broadcast %cst_59 : f32 to vector<1x1xf32>
      %122 = arith.mulf %120, %121 : vector<1x1xf32>
      %cst_60 = arith.constant 0.000000e+00 : f32
      %123 = vector.broadcast %cst_60 : f32 to vector<1x1xf32>
      %124 = arith.maximumf %122, %123 : vector<1x1xf32>
      %125 = arith.subf %93, %92 : vector<1x1xf32>
      %cst_61 = arith.constant 6.250000e-02 : f32
      %126 = vector.broadcast %cst_61 : f32 to vector<1x1xf32>
      %127 = arith.mulf %125, %126 : vector<1x1xf32>
      %cst_62 = arith.constant 0.000000e+00 : f32
      %128 = vector.broadcast %cst_62 : f32 to vector<1x1xf32>
      %129 = arith.maximumf %127, %128 : vector<1x1xf32>
      %cst_63 = arith.constant 5.000000e-01 : f32
      %130 = vector.broadcast %cst_63 : f32 to vector<1x1xf32>
      %131 = arith.mulf %130, %124 : vector<1x1xf32>
      %cst_64 = arith.constant 5.000000e-01 : f32
      %132 = vector.broadcast %cst_64 : f32 to vector<1x1xf32>
      %133 = arith.mulf %132, %129 : vector<1x1xf32>
      %134 = arith.addf %131, %133 : vector<1x1xf32>
      %135 = arith.addf %114, %119 : vector<1x1xf32>
      %cst_65 = arith.constant 1.000000e+00 : f32
      %136 = vector.broadcast %cst_65 : f32 to vector<1x1xf32>
      %137 = arith.mulf %136, %134 : vector<1x1xf32>
      %138 = arith.addf %135, %137 : vector<1x1xf32>
      %cst_66 = arith.constant 3.000000e+00 : f32
      %139 = vector.broadcast %cst_66 : f32 to vector<1x1xf32>
      %140 = arith.divf %138, %139 : vector<1x1xf32>
      %c0_67 = arith.constant 0 : index
      %c0_68 = arith.constant 0 : index
      %141 = vector.load %arg3[%c0_67, %c0_68] : memref<1x1xf32, #tpu.memory_space<vmem>>, vector<1x1xf32>
      tpu.vector_store %arg3[%c0_67, %c0_68], %140 {strides = array<i32>} : memref<1x1xf32, #tpu.memory_space<vmem>>, vector<1x1xf32>,
    } else {
    }
    return
  }
  func.func @transform_1(%arg0: i32) -> (i32, i32, i32) {
    %c0_i32 = arith.constant 0 : i32
    %c0_i32_0 = arith.constant 0 : i32
    %c0_i32_1 = arith.constant 0 : i32
    return %c0_i32, %arg0, %c0_i32_0 : i32, i32, i32
  }
  func.func @transform_2(%arg0: i32) -> (i32, i32) {
    %c0_i32 = arith.constant 0 : i32
    %c0_i32_0 = arith.constant 0 : i32
    %c0_i32_1 = arith.constant 0 : i32
    return %c0_i32, %c0_i32_0 : i32, i32
  }
}

</mosaic_0001>

<llo_original>
// kernel: tpu_custom_call.1
$region0: #{tpu_custom_call.1}
  #allocation0 [shape = 'u32[]', space=smem, size = 0x4, offset = 0x4, fixed_abs, tag = 'smem constant byte address 0x4 - core index']
  #allocation1 [shape = 'u32[144,128]{1,0:T(1,128)}', space=vmem, size = 0x12000, scoped, tag = 'internal scratch']
  #allocation2 [shape = 'f32[8,128]{1,0:T(8,128)}', space=vmem, size = 0x1000, scoped, tag = 'scratch operand']
  #allocation3 [shape = 's32[1]{0}', space=sflag, size = 0x4, scoped, tag = 'scratch operand']
  #allocation4 [shape = 'f32[8,1]{1,0:T(8,128)}', space=vmem, size = 0x1000, scoped, tag = 'scratch operand']
  #allocation5 [shape = 'f32[8,1]{1,0:T(8,128)}', space=vmem, size = 0x1000, scoped, tag = 'scratch operand']
  #allocation6 [shape = 'f32[1,16]{1,0:T(1,128)}', space=vmem, size = 0x200, scoped, tag = 'scratch operand']
  #allocation7 [shape = 'f32[3,8]{1,0:T(4,128)}', space=vmem, size = 0x800, scoped, tag = 'scratch operand']
  #allocation12 [shape = 's32[]', space=sflag, size = 0x4, offset = 0, fixed_abs, tag = 'sflag constant byte address 0x0 - dummy sync flag']
  #allocation13 [shape = 's32[]', space=sflag, size = 0x4, offset = 0, fixed_abs, tag = 'sflag constant byte address 0x0 - dummy sync flag']
  #allocation14 [shape = 'u32[]', space=smem, size = 0x4, offset = 0x44, fixed_abs, tag = 'smem constant byte address 0x44 - assertion arg 0']
  #allocation15 [shape = 'u32[]', space=smem, size = 0x4, offset = 0x48, fixed_abs, tag = 'smem constant byte address 0x48 - assertion arg 1']
  %s0 = inlined_call_operand.hbm [shape: f32[8,128], index: 0, kind: input, shape index: {}]
  %s1 = inlined_call_operand.hbm [shape: f32[3,8,128], index: 1, kind: input, shape index: {}]
  %s2 = inlined_call_operand.hbm [shape: f32[1,1], index: 2, kind: output, shape index: {}]
  %s3 = sld [smem:[#allocation0]]
  $region30: #{tpu_custom_call.1} parent=0
    _
  %s5 = ssub.s32 1, %s3
  %s6 = scalar_select 0, %s5, %s3
  $region1: #{tpu_custom_call.1} parent=0
    #allocation8 [shape = 'u8[12288]{0}', space=vmem, size = 0x3000, scoped, tag = 'input window, operand 1, single buffered']
    #allocation9 [shape = 's32[1]{0}', space=sflag, size = 0x4, scoped, tag = 'scoped memory for tpu_custom_call.1']
    #allocation10 [shape = 's32[1]{0}', space=sflag, size = 0x4, scoped, tag = 'scoped memory for tpu_custom_call.1']
    #allocation11 [shape = 'u8[512]{0}', space=vmem, size = 0x400, scoped, tag = 'output window, operand 0, single buffered']
    %7 = vsyncpa [#allocation9], 0
    %8 = vsyncpa [#allocation10], 0
    // Predicated region
    $region2: #{tpu_custom_call.1} parent=1 // pred_check
      _
    $region3: #{tpu_custom_call.1} parent=1 // pred_check_branch
      %10 = sbr.rel (0) target = $region5
    $region4: #{tpu_custom_call.1} parent=1 // pred_region
      %s12 = ssub.s32 384, 384
      %13 = vsyncadd [#allocation9], %s12
      %s14 = sshll.u32 [#allocation8], 4
      %s15 = int_to_ptr.vmem [resolvable:$true] %s14
      %20 = dma.hbm_to_vmem [thread:$0]  %s1, 384, %s15, [#allocation9], 128, 128, 8
    $region5: #{tpu_custom_call.1} parent=1 // pred_fallthru
      _
    // Predicated region
    $region6: #{tpu_custom_call.1} parent=1 // pred_check
      _
    $region7: #{tpu_custom_call.1} parent=1 // pred_check_branch
      %22 = sbr.rel (0) target = $region9
    $region8: #{tpu_custom_call.1} parent=1 // pred_region
      %23 = dma.done [#allocation9], 384
    $region9: #{tpu_custom_call.1} parent=1 // pred_fallthru
      _
    %p24 = scmp.eq.s32.totalorder 0, 0
    // Predicated region
    $region10: #{tpu_custom_call.1} parent=1 // pred_check
      %p25 = pneg %p24
    $region11: #{tpu_custom_call.1} parent=1 // pred_check_branch
      %27 = sbr.rel (%p25) target = $region13
    $region12: #{tpu_custom_call.1} parent=1 // pred_region
      // Predicated region
      $region14: #{tpu_custom_call.1} parent=12 // pred_check
        _
      $region15: #{tpu_custom_call.1} parent=12 // pred_check_branch
        %29 = sbr.rel target = $region17
      $region16: #{tpu_custom_call.1} parent=12 // pred_region
        %30 = sst [smem:[#allocation14]] [#allocation13]
        %31 = sst [smem:[#allocation15]] [#allocation12]
      $region17: #{tpu_custom_call.1} parent=12 // pred_fallthru
        _
      %33 = shalt.err (0)
      %s35 = sshll.u32 [#allocation2], 4
      %s36 = int_to_ptr.vmem [resolvable:$true] %s35
      %38 = dma.hbm_to_vmem [thread:$0]  %s0, 128, %s36, [#allocation3]
      %s39 = smul.u32 8, 1
      %s40 = sshll.u32 %s39, 4
      %41 = dma.done [#allocation3], %s40
      %v42 = vld [vmem:[#allocation2] sm:$0xff]
      %v43 = vmul.f32 %v42, %v42
      %44 = vadd.xlane.f32.xlu0 %v43
      %v45 = vpop.xlane.xlu0 %44
      %v46 = vmax.f32 %v45, 1e-24
      %v47 = vrsqrt.pop %v46
      %v48 = vmul.f32 %v42, %v47
      %49 = vst [vmem:[#allocation2] sm:$0xff] %v48
      %vm50 = vcmask 7168
      %51 = vst.msk [vmem:[#allocation4] sm:$0xff] %vm50, 0.0
      %52 = vst.msk [vmem:[#allocation5] sm:$0xff] %vm50, 0.0
      %vm53 = vcmask 122880
      %54 = vst.msk [vmem:[#allocation6] sm:$0x1] %vm53, 0.0
      %vm55 = vcmask 59392
      %56 = vst.msk [vmem:[#allocation7] sm:$0x7] %vm55, 0.0
    $region13: #{tpu_custom_call.1} parent=1 // pred_fallthru
      _
    %v57 = vld [vmem:[#allocation8] sm:$0xff]
    %v58 = vld [vmem:[#allocation8 + $0x8] sm:$0xff]
    %v59 = vld [vmem:[#allocation8 + $0x10] sm:$0xff]
    %v60 = vmul.f32 %v57, %v57
    %v61 = vmul.f32 %v58, %v58
    %v62 = vmul.f32 %v59, %v59
    %63 = vadd.xlane.f32.xlu0 %v60
    %v64 = vpop.xlane.xlu0 %63
    %65 = vadd.xlane.f32.xlu0 %v61
    %v66 = vpop.xlane.xlu0 %65
    %67 = vadd.xlane.f32.xlu0 %v62
    %v68 = vpop.xlane.xlu0 %67
    %v69 = vmax.f32 %v64, 1e-24
    %v70 = vmax.f32 %v66, 1e-24
    %v71 = vmax.f32 %v68, 1e-24
    %v72 = vrsqrt.pop %v69
    %v73 = vrsqrt.pop %v70
    %v74 = vrsqrt.pop %v71
    %v75 = vmul.f32 %v57, %v72
    %v76 = vmul.f32 %v58, %v73
    %v77 = vmul.f32 %v59, %v74
    %v78 = vld [vmem:[#allocation2] sm:$0xff]
    %79 = vmatprep.subr.mxu0 0.0
    %80 = vmatpush1.xpose.msra.mxu0 %v75
    %81 = vmatprep.subr.mxu0 0.0
    %82 = vmatpush1.xpose.msra.mxu0 %v76
    %83 = vmatprep.subr.mxu0 0.0
    %84 = vmatpush1.xpose.msra.mxu0 0.0
    %85 = vmatprep.subr.mxu0 0.0
    %86 = vmatpush1.xpose.msra.mxu0 0.0
    %87 = vmatprep.subr.mxu0 0.0
    %88 = vmatpush1.xpose.msra.mxu0 0.0
    %89 = vmatprep.subr.mxu0 0.0
    %90 = vmatpush1.xpose.msra.mxu0 0.0
    %91 = vmatprep.subr.mxu0 0.0
    %92 = vmatpush1.xpose.msra.mxu0 0.0
    %93 = vmatprep.subr.mxu0 0.0
    %94 = vmatpush1.xpose.msra.mxu0 0.0
    %95 = vmatprep.subr.mxu0 0.0
    %96 = vmatpush1.xpose.msra.mxu0 0.0
    %97 = vmatprep.subr.mxu0 0.0
    %98 = vmatpush1.xpose.msra.mxu0 0.0
    %99 = vmatprep.subr.mxu0 0.0
    %100 = vmatpush1.xpose.msra.mxu0 0.0
    %101 = vmatprep.subr.mxu0 0.0
    %102 = vmatpush1.xpose.msra.mxu0 0.0
    %103 = vmatprep.subr.mxu0 0.0
    %104 = vmatpush1.xpose.msra.mxu0 0.0
    %105 = vmatprep.subr.mxu0 0.0
    %106 = vmatpush1.xpose.msra.mxu0 0.0
    %107 = vmatprep.subr.mxu0 0.0
    %108 = vmatpush1.xpose.msra.mxu0 0.0
    %109 = vmatprep.subr.mxu0 0.0
    %110 = vmatpush1.xpose.msra.mxu0 0.0
    %111 = vmatprep.subr.mxu0 0.0
    %112 = vmatpush1.xpose.msra.mxu0 0.0
    %113 = vmatprep.subr.mxu0 0.0
    %114 = vmatpush1.xpose.msra.mxu0 0.0
    %115 = vmatprep.subr.mxu0 0.0
    %116 = vmatpush1.xpose.msra.mxu0 0.0
    %117 = vmatprep.subr.mxu0 0.0
    %118 = vmatpush1.xpose.msra.mxu0 0.0
    %119 = vmatprep.subr.mxu0 0.0
    %120 = vmatpush1.xpose.msra.mxu0 0.0
    %121 = vmatprep.subr.mxu0 0.0
    %122 = vmatpush1.xpose.msra.mxu0 0.0
    %123 = vmatprep.subr.mxu0 0.0
    %124 = vmatpush1.xpose.msra.mxu0 0.0
    %125 = vmatprep.subr.mxu0 0.0
    %126 = vmatpush1.xpose.msra.mxu0 0.0
    %127 = vmatprep.subr.mxu0 0.0
    %128 = vmatpush1.xpose.msra.mxu0 0.0
    %129 = vmatprep.subr.mxu0 0.0
    %130 = vmatpush1.xpose.msra.mxu0 0.0
    %131 = vmatprep.subr.mxu0 0.0
    %132 = vmatpush1.xpose.msra.mxu0 0.0
    %133 = vmatprep.subr.mxu0 0.0
    %134 = vmatpush1.xpose.msra.mxu0 0.0
    %135 = vmatprep.subr.mxu0 0.0
    %136 = vmatpush1.xpose.msra.mxu0 0.0
    %137 = vmatprep.subr.mxu0 0.0
    %138 = vmatpush1.xpose.msra.mxu0 0.0
    %139 = vmatprep.subr.mxu0 0.0
    %140 = vmatpush1.xpose.msra.mxu0 0.0
    %141 = vmatprep.subr.mxu0 0.0
    %142 = vmatpush1.xpose.msra.mxu0 0.0
    %143 = vmatprep.mubr.f32.mxu0 0.0
    %144 = vmatmul.mubr.f32.gmra.mrb[0].mxu0 %v78
    %v145 = vpop.f32.mrb[0].mxu0
    %v146 = vadd.f32 0.0, %v145
    %v147 = vpop.f32.mrb[0].mxu0
    %148 = vdwg.mxu0
    %v149 = vmul.f32 %v146, 10.0
    %v150 = vsub.f32 %v149, 10.0
    %v151 = vmul.f32 %v150, 1.442695
    %v152 = vpow.pop %v151
    %v153 = vld [vmem:[#allocation4] sm:$0xff]
    %vm154 = vcmask 64512
    %v155 = vsel %vm154, %v152, 0.0
    %156 = vadd.xlane.f32.xlu0 %v155
    %v157 = vpop.xlane.xlu0 %156
    %v158 = vadd.f32 %v153, %v157
    %vm159 = vcmask 7168
    %160 = vst.msk [vmem:[#allocation4] sm:$0xff] %vm159, %v158
    %v161 = vld [vmem:[#allocation5] sm:$0xff]
    %163 = vrot.lane.b32.xlu0 %v152, 120
    %v164 = vpop.permute.xlu0 %163
    %v166 = vsel %vm154, %v164, 0.0
    %167 = vadd.xlane.f32.xlu0 %v166
    %v168 = vpop.xlane.xlu0 %167
    %v169 = vadd.f32 %v161, %v168
    %170 = vst.msk [vmem:[#allocation5] sm:$0xff] %vm159, %v169
    %v171 = vld [vmem:[#allocation6] sm:$0x1]
    %vm172 = vcmask 130048
    %v173 = vsel %vm172, %v152, 0.0
    %v174 = vrot.slane %v173, 4
    %v175 = vadd.f32 %v173, %v174
    %v176 = vrot.slane %v175, 2
    %v177 = vadd.f32 %v175, %v176
    %v178 = vrot.slane %v177, 1
    %v179 = vadd.f32 %v177, %v178
    %v180 = vlog2.pop %v179
    %v181 = vmul.f32 %v180, 0.6931472
    %v182 = vadd.f32 %v171, %v181
    %vm183 = vcmask 122880
    %184 = vst.msk [vmem:[#allocation6] sm:$0x1] %vm183, %v182
    %s185 = smul.u32 0, 8
    %s186 = scalar_lea.vmem [#allocation2], %s185
    %v187 = vld [vmem:[%s186] sm:$0xff]
    %v188 = vld [vmem:[#allocation7] sm:$0x7]
    %v189 = vmul.f32 %v187, %v75
    %v190 = vmul.f32 %v187, %v76
    %v191 = vmul.f32 %v187, %v77
    %192 = vadd.xlane.f32.xlu0 %v189
    %v193 = vpop.xlane.xlu0 %192
    %194 = vadd.xlane.f32.xlu0 %v190
    %v195 = vpop.xlane.xlu0 %194
    %196 = vadd.xlane.f32.xlu0 %v191
    %v197 = vpop.xlane.xlu0 %196
    %v201 = vlaneseq
    %v202 = vand.u32 %v201, 127
    %v203 = vlaneseq
    %v204 = vshrl.u32 %v203, 7
    %v205 = vsub.s32 %v202, %v204
    %v206 = vrot.slane %v193, %v205
    %v207 = vlaneseq
    %v208 = vshrl.u32 %v207, 7
    %v209 = vsub.s32 %v202, %v208
    %v210 = vrot.slane %v195, %v209
    %v211 = vlaneseq
    %v212 = vshrl.u32 %v211, 7
    %v213 = vsub.s32 %v202, %v212
    %v214 = vrot.slane %v197, %v213
    %vm215 = vcmask 1041409
    %v216 = vsel %vm215, %v210, %v206
    %vm217 = vcmask 1042434
    %v218 = vsel %vm217, %v214, %v216
    %v220 = vadd.f32 %v188, %v218
    %vm221 = vcmask 59392
    %222 = vst.msk [vmem:[#allocation7] sm:$0x7] %vm221, %v220
    // Predicated region
    $region18: #{tpu_custom_call.1} parent=1 // pred_check
      %p223 = pneg %p24
    $region19: #{tpu_custom_call.1} parent=1 // pred_check_branch
      %225 = sbr.rel (%p223) target = $region21
    $region20: #{tpu_custom_call.1} parent=1 // pred_region
      %v226 = vld [vmem:[#allocation4] sm:$0xff]
      %v227 = vlog2.pop %v226
      %v228 = vmul.f32 %v227, 0.6931472
      %v229 = vsel %vm159, %v228, 0.0
      %230 = vadd.xlane.f32.xlu0 %v229
      %v231 = vpop.xlane.xlu0 %230
      %v232 = vrot.slane %v231, 4
      %v233 = vadd.f32 %v231, %v232
      %v234 = vrot.slane %v233, 2
      %v235 = vadd.f32 %v233, %v234
      %v236 = vrot.slane %v235, 1
      %v237 = vadd.f32 %v235, %v236
      %s238 = vtos %v237
      %v239 = vstv %s238
      %v240 = vadd.f32 %v239, 80.0
      %v241 = vld [vmem:[#allocation5] sm:$0xff]
      %v242 = vlog2.pop %v241
      %v243 = vmul.f32 %v242, 0.6931472
      %v244 = vsel %vm159, %v243, 0.0
      %245 = vadd.xlane.f32.xlu0 %v244
      %v246 = vpop.xlane.xlu0 %245
      %v247 = vrot.slane %v246, 4
      %v248 = vadd.f32 %v246, %v247
      %v249 = vrot.slane %v248, 2
      %v250 = vadd.f32 %v248, %v249
      %v251 = vrot.slane %v250, 1
      %v252 = vadd.f32 %v250, %v251
      %s253 = vtos %v252
      %v254 = vstv %s253
      %v255 = vadd.f32 %v254, 80.0
      %v256 = vld [vmem:[#allocation6] sm:$0x1]
      %vm257 = vcmask 57344
      %v258 = vsel %vm257, %v256, 0.0
      %259 = vadd.xlane.f32.xlu0 %v258
      %v260 = vpop.xlane.xlu0 %259
      %v261 = vrot.slane %v260, 4
      %v262 = vadd.f32 %v260, %v261
      %v263 = vrot.slane %v262, 2
      %v264 = vadd.f32 %v262, %v263
      %v265 = vrot.slane %v264, 1
      %v266 = vadd.f32 %v264, %v265
      %s267 = vtos %v266
      %v268 = vstv %s267
      %v269 = vadd.f32 %v268, 80.0
      %v271 = vlaneseq
      %v272 = vshrl.u32 %v271, 7
      %v273 = vsub.s32 0, %v272
      %v274 = vrot.slane %v256, %v273
      %275 = vrot.lane.b32.xlu0 %v274, 120
      %v276 = vpop.permute.xlu0 %275
      %v278 = vsel %vm257, %v276, 0.0
      %279 = vadd.xlane.f32.xlu0 %v278
      %v280 = vpop.xlane.xlu0 %279
      %v281 = vrot.slane %v280, 4
      %v282 = vadd.f32 %v280, %v281
      %v283 = vrot.slane %v282, 2
      %v284 = vadd.f32 %v282, %v283
      %v285 = vrot.slane %v284, 1
      %v286 = vadd.f32 %v284, %v285
      %s287 = vtos %v286
      %v288 = vstv %s287
      %v289 = vadd.f32 %v288, 80.0
      %v290 = vld [vmem:[#allocation7] sm:$0x7]
      %v291 = vsel %vm221, %v290, 0.0
      %292 = vadd.xlane.f32.xlu0 %v291
      %v293 = vpop.xlane.xlu0 %292
      %v294 = vmul.f32 %v293, 1.25
      %v295 = vmul.f32 %v240, 0.125
      %v296 = vsub.f32 %v295, %v294
      %v297 = vmul.f32 %v269, 0.125
      %v298 = vsub.f32 %v297, %v294
      %v299 = vmul.f32 %v255, 0.125
      %v300 = vsub.f32 %v299, %v294
      %v301 = vmul.f32 %v289, 0.125
      %v302 = vsub.f32 %v301, %v294
      %v303 = vmul.f32 %v296, 0.5
      %v304 = vmul.f32 %v298, 0.5
      %v305 = vadd.f32 %v303, %v304
      %v306 = vmul.f32 %v300, 0.5
      %v307 = vmul.f32 %v302, 0.5
      %v308 = vadd.f32 %v306, %v307
      %v310 = vrot.slane %v293, 6
      %v312 = vsub.f32 %v293, %v310
      %v313 = vmul.f32 %v312, 0.0625
      %v314 = vmax.f32 %v313, 0.0
      %v315 = vrot.slane %v293, 7
      %v317 = vsub.f32 %v293, %v315
      %v318 = vmul.f32 %v317, 0.0625
      %v319 = vmax.f32 %v318, 0.0
      %v320 = vmul.f32 %v314, 0.5
      %v321 = vmul.f32 %v319, 0.5
      %v322 = vadd.f32 %v320, %v321
      %v324 = vrot.slane %v308, 1
      %v326 = vadd.f32 %v305, %v324
      %v328 = vrot.slane %v322, 2
      %v330 = vadd.f32 %v326, %v328
      %v331 = vrcp.pop 3.0
      %v332 = vmul.f32 %v330, %v331
      %vm333 = vcmask 0
      %334 = vst.msk [vmem:[#allocation11] sm:$0x1] %vm333, %v332
    $region21: #{tpu_custom_call.1} parent=1 // pred_fallthru
      _
    // Predicated region
    $region22: #{tpu_custom_call.1} parent=1 // pred_check
      _
    $region23: #{tpu_custom_call.1} parent=1 // pred_check_branch
      %336 = sbr.rel (0) target = $region25
    $region24: #{tpu_custom_call.1} parent=1 // pred_region
      %s338 = ssub.s32 16, 16
      %339 = vsyncadd [#allocation10], %s338
      %s341 = sshll.u32 [#allocation11], 4
      %s342 = int_to_ptr.vmem [resolvable:$true] %s341
      %344 = dma.vmem_to_hbm [thread:$0]  %s342, 16, %s2, [#allocation10]
    $region25: #{tpu_custom_call.1} parent=1 // pred_fallthru
      _
    // Predicated region
    $region26: #{tpu_custom_call.1} parent=1 // pred_check
      _
    $region27: #{tpu_custom_call.1} parent=1 // pred_check_branch
      %346 = sbr.rel (0) target = $region29
    $region28: #{tpu_custom_call.1} parent=1 // pred_region
      %347 = dma.done [#allocation10], 16
    $region29: #{tpu_custom_call.1} parent=1 // pred_fallthru
      _
    %348 = vsyncpa [#allocation9], 1
    %349 = vsyncpa [#allocation10], 1
  %350 = vsyncmov [#allocation3]
  %s351 = vpop.sfrf %350
  %p352 = scmp.eq.s32.totalorder %s351, 0
  %p353 = pneg %p352
  %355 = shalt.err (%p353)

</llo_original>
